<compile_context>
chip_gen: v6e
topology: v6e:2x2x1
jax: 0.10.0
libtpu: 0.0.40
codegen_flags: <defaults>
</compile_context>

<pallas_src>
import jax
import jax.numpy as jnp
from jax.experimental import pallas as pl
from jax.experimental.pallas import tpu as pltpu

EPS = 1e-5
LANE = 128
SUBLANE = 16                      # bf16 packs 16 rows per vreg (output is bf16)
VMEM_BUDGET = 40 << 20            # conservative vs v7x's 64 MiB per TensorCore


def _round_up(x, m):
    return ((x + m - 1) // m) * m


# --------------------------------------------------------------------------
# Kernel: y = relu(x @ W1' + b1') @ W2' + b2'   (BN already folded into W,b)
# --------------------------------------------------------------------------
def _backbone_kernel(x_ref, w1_ref, b1_ref, w2_ref, b2_ref, o_ref):
    # f32 -> bf16 cast in-kernel (VPU filler under a mem-bound regime; avoids a
    # separate wrapper-side HBM pass over x).
    x = x_ref[...].astype(w1_ref.dtype)                       # (TILE_N, IN_P)
    h = jnp.dot(x, w1_ref[...], preferred_element_type=jnp.float32)
    h = jnp.maximum(h + b1_ref[...], 0.0)                     # bias + ReLU in f32
    # Dropout(p=0.3): identity in eval mode.
    h = h.astype(w2_ref.dtype)                                # bf16 for MXU
    y = jnp.dot(h, w2_ref[...], preferred_element_type=jnp.float32)
    o_ref[...] = (y + b2_ref[...]).astype(o_ref.dtype)        # bf16 lane-dense store


# --------------------------------------------------------------------------
# One-time parameter preparation (outside the per-call hot path):
#   fold BatchNorm into Linear, transpose to (in, out), pad to lane multiples,
#   cast weights to bf16.
# --------------------------------------------------------------------------
def fold_params(params, compute_dtype=jnp.bfloat16):
    w1 = params["w1"].astype(jnp.float32)   # (hidden, in)
    w2 = params["w2"].astype(jnp.float32)   # (out, hidden)
    hidden_dim, input_dim = w1.shape
    output_dim = w2.shape[0]

    scale1 = params["g1"] * jax.lax.rsqrt(params["rv1"] + EPS)
    scale2 = params["g2"] * jax.lax.rsqrt(params["rv2"] + EPS)

    # Fold BN into Linear:  (x@W^T + b - rm)*s + be  ==  x@(W*s)^T + ((b-rm)*s+be)
    w1f = (w1 * scale1[:, None]).T          # (in, hidden)
    b1f = (params["b1"] - params["rm1"]) * scale1 + params["be1"]
    w2f = (w2 * scale2[:, None]).T          # (hidden, out)
    b2f = (params["b2"] - params["rm2"]) * scale2 + params["be2"]

    in_p = _round_up(input_dim, LANE)
    hid_p = _round_up(hidden_dim, LANE)
    out_p = _round_up(output_dim, LANE)

    w1p = jnp.zeros((in_p, hid_p), jnp.float32).at[:input_dim, :hidden_dim].set(w1f)
    w2p = jnp.zeros((hid_p, out_p), jnp.float32).at[:hidden_dim, :output_dim].set(w2f)
    b1p = jnp.zeros((1, hid_p), jnp.float32).at[0, :hidden_dim].set(b1f)
    b2p = jnp.zeros((1, out_p), jnp.float32).at[0, :output_dim].set(b2f)

    return {
        "w1": w1p.astype(compute_dtype),
        "b1": b1p,                          # biases stay f32
        "w2": w2p.astype(compute_dtype),
        "b2": b2p,
        "input_dim": input_dim,
        "output_dim": output_dim,
    }


# --------------------------------------------------------------------------
# Wrapper: grid over batch, resident weights, bf16 output.
# --------------------------------------------------------------------------
def single_view_backbone(x, folded, *, tile_n=1024):
    n, input_dim = x.shape
    assert input_dim == folded["input_dim"]
    out_dim = folded["output_dim"]

    w1, b1, w2, b2 = folded["w1"], folded["b1"], folded["w2"], folded["b2"]
    in_p, hid_p = w1.shape
    out_p = w2.shape[1]

    # --- batch tile: large for HBM-bandwidth efficiency, but
    #     * rounded to 16 sublanes (bf16 output packing),
    #     * capped at half the (rounded) batch so the parallel grid has >=2
    #       steps and both v7x TensorCores get work.
    n_sub = _round_up(n, SUBLANE)
    half_batch = _round_up(pl.cdiv(n_sub, 2), SUBLANE)
    tile_n = max(SUBLANE, min(tile_n, half_batch))

    # --- VMEM budget gate (matters on v7x's 64 MiB/TC): shrink tile_n first.
    weight_bytes = (in_p * hid_p + hid_p * out_p) * 2 + (hid_p + out_p) * 4

    def _tile_bytes(t):
        return (2 * t * in_p * 4      # x double-buffered (f32 in HBM)
                + 2 * t * out_p * 2   # out double-buffered (bf16)
                + 2 * t * hid_p * 4)  # f32 intermediate / headroom

    while tile_n > SUBLANE and weight_bytes + _tile_bytes(tile_n) > VMEM_BUDGET:
        tile_n = max(SUBLANE, _round_up(tile_n // 2, SUBLANE))

    n_pad = _round_up(n, tile_n)
    grid = (n_pad // tile_n,)

    # --- pass x straight through when already aligned; pad (f32, no cast)
    #     only for the ragged tail / non-multiple feature dim.
    if n_pad != n or in_p != input_dim:
        x_in = jnp.pad(x, ((0, n_pad - n), (0, in_p - input_dim)))
    else:
        x_in = x

    vmem_limit = int(weight_bytes + _tile_bytes(tile_n) + (2 << 20))

    out = pl.pallas_call(
        _backbone_kernel,
        out_shape=jax.ShapeDtypeStruct((n_pad, out_p), jnp.bfloat16),
        grid=grid,
        in_specs=[
            pl.BlockSpec((tile_n, in_p), lambda i: (i, 0)),   # x tiles (f32)
            pl.BlockSpec((in_p, hid_p), lambda i: (0, 0)),    # W1 resident
            pl.BlockSpec((1, hid_p), lambda i: (0, 0)),       # b1 resident
            pl.BlockSpec((hid_p, out_p), lambda i: (0, 0)),   # W2 resident
            pl.BlockSpec((1, out_p), lambda i: (0, 0)),       # b2 resident
        ],
        out_specs=pl.BlockSpec((tile_n, out_p), lambda i: (i, 0)),
        compiler_params=pltpu.CompilerParams(
            dimension_semantics=("parallel",),
            vmem_limit_bytes=vmem_limit,
        ),
    )(x_in, w1, b1, w2, b2)

    # Padded batch rows are NOT zero (they equal relu(b1')@W2' + b2') — the
    # [:n] slice below is mandatory.
    return out[:n, :out_dim]


# --------------------------------------------------------------------------
# Deterministic synthetic parameters + pure-JAX reference (PyTorch semantics)
# --------------------------------------------------------------------------
def init_params(key, input_dim, hidden_dim, output_dim):
    ks = jax.random.split(key, 8)
    p = {}
    p["w1"] = jax.random.normal(ks[0], (hidden_dim, input_dim), jnp.float32) * 0.1
    p["b1"] = jax.random.normal(ks[1], (hidden_dim,), jnp.float32) * 0.1
    p["g1"] = 1.0 + 0.1 * jax.random.normal(ks[2], (hidden_dim,), jnp.float32)
    p["be1"] = 0.1 * jax.random.normal(ks[3], (hidden_dim,), jnp.float32)
    p["rm1"] = 0.05 * jnp.arange(hidden_dim, dtype=jnp.float32) / hidden_dim
    p["rv1"] = 1.0 + 0.1 * jnp.cos(jnp.arange(hidden_dim, dtype=jnp.float32))
    p["w2"] = jax.random.normal(ks[4], (output_dim, hidden_dim), jnp.float32) * 0.1
    p["b2"] = jax.random.normal(ks[5], (output_dim,), jnp.float32) * 0.1
    p["g2"] = 1.0 + 0.1 * jax.random.normal(ks[6], (output_dim,), jnp.float32)
    p["be2"] = 0.1 * jax.random.normal(ks[7], (output_dim,), jnp.float32)
    p["rm2"] = 0.03 * jnp.arange(output_dim, dtype=jnp.float32) / output_dim
    p["rv2"] = 1.0 + 0.1 * jnp.sin(jnp.arange(output_dim, dtype=jnp.float32))
    return p


def reference(x, p):
    h = x @ p["w1"].T + p["b1"]
    h = (h - p["rm1"]) / jnp.sqrt(p["rv1"] + EPS) * p["g1"] + p["be1"]
    h = jnp.maximum(h, 0.0)
    y = h @ p["w2"].T + p["b2"]
    y = (y - p["rm2"]) / jnp.sqrt(p["rv2"] + EPS) * p["g2"] + p["be2"]
    return y


if __name__ == "__main__":
    key = jax.random.PRNGKey(0)
    k_x, k_p = jax.random.split(key)

    batch, input_dim, hidden_dim, output_dim = 8, 32, 64, 16
    x = jax.random.normal(k_x, (batch, input_dim), jnp.float32)
    params = init_params(k_p, input_dim, hidden_dim, output_dim)

    folded = fold_params(params)                 # one-time, outside hot path
    out = single_view_backbone(x, folded)
    out = jax.block_until_ready(out)

    ref = reference(x, params)
    assert out.shape == (batch, output_dim), out.shape
    out_f32 = out.astype(jnp.float32)
    max_err = float(jnp.max(jnp.abs(out_f32 - ref)))
    # bf16 matmul operands + bf16 output store, f32 accumulation => small,
    # bounded error.
    assert jnp.allclose(out_f32, ref, atol=5e-2, rtol=3e-2), max_err
    print("KERNEL_OK")
</pallas_src>

<mosaic_0001>
module attributes {stable_mosaic.version = 11 : i64} {
  func.func @_backbone_kernel(%arg0: i32, %arg1: memref<16x128xf32, #tpu.memory_space<vmem>>, %arg2: memref<128x128xbf16, #tpu.memory_space<vmem>>, %arg3: memref<1x128xf32, #tpu.memory_space<vmem>>, %arg4: memref<128x128xbf16, #tpu.memory_space<vmem>>, %arg5: memref<1x128xf32, #tpu.memory_space<vmem>>, %arg6: memref<16x128xbf16, #tpu.memory_space<vmem>>) attributes {dimension_semantics = [#tpu.dimension_semantics<parallel>], iteration_bounds = array<i64: 1>, scalar_prefetch = 0 : i64, scratch_operands = 0 : i64, tpu.core_type = #tpu.core_type<tc>, window_params = [{transform_indices = @transform_0, window_bounds = array<i64: 16, 128>}, {pipeline_mode = #tpu.pipeline_mode<synchronous>, transform_indices = @transform_1, window_bounds = array<i64: 128, 128>}, {pipeline_mode = #tpu.pipeline_mode<synchronous>, transform_indices = @transform_2, window_bounds = array<i64: 1, 128>}, {pipeline_mode = #tpu.pipeline_mode<synchronous>, transform_indices = @transform_3, window_bounds = array<i64: 128, 128>}, {pipeline_mode = #tpu.pipeline_mode<synchronous>, transform_indices = @transform_4, window_bounds = array<i64: 1, 128>}, {transform_indices = @transform_5, window_bounds = array<i64: 16, 128>}]} {
    %c0 = arith.constant 0 : index
    %c0_0 = arith.constant 0 : index
    %0 = vector.load %arg1[%c0, %c0_0] : memref<16x128xf32, #tpu.memory_space<vmem>>, vector<16x128xf32>
    %1 = arith.truncf %0 : vector<16x128xf32> to vector<16x128xbf16>
    %c0_1 = arith.constant 0 : index
    %c0_2 = arith.constant 0 : index
    %2 = vector.load %arg2[%c0_1, %c0_2] : memref<128x128xbf16, #tpu.memory_space<vmem>>, vector<128x128xbf16>
    %cst = arith.constant dense<0.000000e+00> : vector<16x128xf32>
    %3 = tpu.matmul %1, %2, %cst {dimension_numbers = #tpu.dot_dimension_numbers<[1], [0], [0], [1], [0, 0, 1, 1], [], []>} : vector<16x128xbf16>, vector<128x128xbf16>, vector<16x128xf32> -> vector<16x128xf32>
    %c0_3 = arith.constant 0 : index
    %c0_4 = arith.constant 0 : index
    %4 = vector.load %arg3[%c0_3, %c0_4] : memref<1x128xf32, #tpu.memory_space<vmem>>, vector<1x128xf32>
    %5 = vector.broadcast %4 : vector<1x128xf32> to vector<16x128xf32>
    %6 = arith.addf %3, %5 : vector<16x128xf32>
    %cst_5 = arith.constant 0.000000e+00 : f32
    %7 = vector.broadcast %cst_5 : f32 to vector<16x128xf32>
    %8 = arith.maximumf %6, %7 : vector<16x128xf32>
    %9 = arith.truncf %8 : vector<16x128xf32> to vector<16x128xbf16>
    %c0_6 = arith.constant 0 : index
    %c0_7 = arith.constant 0 : index
    %10 = vector.load %arg4[%c0_6, %c0_7] : memref<128x128xbf16, #tpu.memory_space<vmem>>, vector<128x128xbf16>
    %cst_8 = arith.constant dense<0.000000e+00> : vector<16x128xf32>
    %11 = tpu.matmul %9, %10, %cst_8 {dimension_numbers = #tpu.dot_dimension_numbers<[1], [0], [0], [1], [0, 0, 1, 1], [], []>} : vector<16x128xbf16>, vector<128x128xbf16>, vector<16x128xf32> -> vector<16x128xf32>
    %c0_9 = arith.constant 0 : index
    %c0_10 = arith.constant 0 : index
    %12 = vector.load %arg5[%c0_9, %c0_10] : memref<1x128xf32, #tpu.memory_space<vmem>>, vector<1x128xf32>
    %13 = vector.broadcast %12 : vector<1x128xf32> to vector<16x128xf32>
    %14 = arith.addf %11, %13 : vector<16x128xf32>
    %15 = arith.truncf %14 : vector<16x128xf32> to vector<16x128xbf16>
    %c0_11 = arith.constant 0 : index
    %c0_12 = arith.constant 0 : index
    %16 = vector.load %arg6[%c0_11, %c0_12] : memref<16x128xbf16, #tpu.memory_space<vmem>>, vector<16x128xbf16>
    tpu.vector_store %arg6[%c0_11, %c0_12], %15 {strides = array<i32>} : memref<16x128xbf16, #tpu.memory_space<vmem>>, vector<16x128xbf16>,
    return
  }
  func.func @transform_0(%arg0: i32) -> (i32, i32) {
    %c0_i32 = arith.constant 0 : i32
    %c0_i32_0 = arith.constant 0 : i32
    return %arg0, %c0_i32 : i32, i32
  }
  func.func @transform_1(%arg0: i32) -> (i32, i32) {
    %c0_i32 = arith.constant 0 : i32
    %c0_i32_0 = arith.constant 0 : i32
    %c0_i32_1 = arith.constant 0 : i32
    return %c0_i32, %c0_i32_0 : i32, i32
  }
  func.func @transform_2(%arg0: i32) -> (i32, i32) {
    %c0_i32 = arith.constant 0 : i32
    %c0_i32_0 = arith.constant 0 : i32
    %c0_i32_1 = arith.constant 0 : i32
    return %c0_i32, %c0_i32_0 : i32, i32
  }
  func.func @transform_3(%arg0: i32) -> (i32, i32) {
    %c0_i32 = arith.constant 0 : i32
    %c0_i32_0 = arith.constant 0 : i32
    %c0_i32_1 = arith.constant 0 : i32
    return %c0_i32, %c0_i32_0 : i32, i32
  }
  func.func @transform_4(%arg0: i32) -> (i32, i32) {
    %c0_i32 = arith.constant 0 : i32
    %c0_i32_0 = arith.constant 0 : i32
    %c0_i32_1 = arith.constant 0 : i32
    return %c0_i32, %c0_i32_0 : i32, i32
  }
  func.func @transform_5(%arg0: i32) -> (i32, i32) {
    %c0_i32 = arith.constant 0 : i32
    %c0_i32_0 = arith.constant 0 : i32
    return %arg0, %c0_i32 : i32, i32
  }
}

</mosaic_0001>

<llo_original>
// kernel: tpu_custom_call.1
$region0: #{tpu_custom_call.1}
  #allocation0 [shape = 'u32[]', space=smem, size = 0x4, offset = 0x4, fixed_abs, tag = 'smem constant byte address 0x4 - core index']
  #allocation1 [shape = 'u32[144,128]{1,0:T(1,128)}', space=vmem, size = 0x12000, scoped, tag = 'internal scratch']
  %s0 = inlined_call_operand.hbm [shape: f32[16,128], index: 0, kind: input, shape index: {}]
  %s1 = inlined_call_operand.hbm [shape: bf16[128,128], index: 1, kind: input, shape index: {}]
  %s2 = inlined_call_operand.vmem [shape: f32[1,128], index: 2, kind: input, shape index: {}]
  %s3 = inlined_call_operand.hbm [shape: bf16[128,128], index: 3, kind: input, shape index: {}]
  %s4 = inlined_call_operand.vmem [shape: f32[1,128], index: 4, kind: input, shape index: {}]
  %s5 = inlined_call_operand.hbm [shape: bf16[16,128], index: 5, kind: output, shape index: {}]
  %s6 = sld [smem:[#allocation0]]
  $region42: #{tpu_custom_call.1} parent=0
    _
  %s8 = ssub.s32 1, %s6
  %s9 = scalar_select 0, %s8, %s6
  $region1: #{tpu_custom_call.1} parent=0
    #allocation2 [shape = 'u8[8192]{0}', space=vmem, size = 0x2000, scoped, tag = 'input window, operand 0, single buffered']
    #allocation3 [shape = 's32[1]{0}', space=sflag, size = 0x4, scoped, tag = 'scoped memory for tpu_custom_call.1']
    #allocation4 [shape = 's32[1]{0}', space=sflag, size = 0x4, scoped, tag = 'scoped memory for tpu_custom_call.1']
    #allocation5 [shape = 'u8[32768]{0}', space=vmem, size = 0x8000, scoped, tag = 'input window, operand 1, single buffered']
    #allocation6 [shape = 's32[1]{0}', space=sflag, size = 0x4, scoped, tag = 'scoped memory for tpu_custom_call.1']
    #allocation7 [shape = 'u8[32768]{0}', space=vmem, size = 0x8000, scoped, tag = 'input window, operand 3, single buffered']
    #allocation8 [shape = 'u8[4096]{0}', space=vmem, size = 0x1000, scoped, tag = 'output window, operand 0, single buffered']
    %10 = vsyncpa [#allocation3], 0
    %11 = vsyncpa [#allocation6], 0
    %12 = vsyncpa [#allocation4], 0
    // Predicated region
    $region2: #{tpu_custom_call.1} parent=1 // pred_check
      _
    $region3: #{tpu_custom_call.1} parent=1 // pred_check_branch
      %14 = sbr.rel (0) target = $region5
    $region4: #{tpu_custom_call.1} parent=1 // pred_region
      %s16 = ssub.s32 256, 256
      %17 = vsyncadd [#allocation3], %s16
      %s18 = sshll.u32 [#allocation2], 4
      %s19 = int_to_ptr.vmem [resolvable:$true] %s18
      %24 = dma.hbm_to_vmem [thread:$0]  %s0, 256, %s19, [#allocation3], 128, 128, 8
    $region5: #{tpu_custom_call.1} parent=1 // pred_fallthru
      _
    // Predicated region
    $region6: #{tpu_custom_call.1} parent=1 // pred_check
      _
    $region7: #{tpu_custom_call.1} parent=1 // pred_check_branch
      %26 = sbr.rel (0) target = $region9
    $region8: #{tpu_custom_call.1} parent=1 // pred_region
      %s28 = ssub.s32 1024, 1024
      %29 = vsyncadd [#allocation6], %s28
      %s30 = sshll.u32 [#allocation5], 4
      %s31 = int_to_ptr.vmem [resolvable:$true] %s30
      %36 = dma.hbm_to_vmem [thread:$0]  %s1, 1024, %s31, [#allocation6], 64, 64, 4
    $region9: #{tpu_custom_call.1} parent=1 // pred_fallthru
      _
    // Predicated region
    $region10: #{tpu_custom_call.1} parent=1 // pred_check
      _
    $region11: #{tpu_custom_call.1} parent=1 // pred_check_branch
      %38 = sbr.rel (0) target = $region13
    $region12: #{tpu_custom_call.1} parent=1 // pred_region
      _
    $region13: #{tpu_custom_call.1} parent=1 // pred_fallthru
      _
    // Predicated region
    $region14: #{tpu_custom_call.1} parent=1 // pred_check
      _
    $region15: #{tpu_custom_call.1} parent=1 // pred_check_branch
      %40 = sbr.rel (0) target = $region17
    $region16: #{tpu_custom_call.1} parent=1 // pred_region
      %s42 = ssub.s32 1024, 1024
      %43 = vsyncadd [#allocation6], %s42
      %s44 = sshll.u32 [#allocation7], 4
      %s45 = int_to_ptr.vmem [resolvable:$true] %s44
      %50 = dma.hbm_to_vmem [thread:$0]  %s3, 1024, %s45, [#allocation6], 64, 64, 4
    $region17: #{tpu_custom_call.1} parent=1 // pred_fallthru
      _
    // Predicated region
    $region18: #{tpu_custom_call.1} parent=1 // pred_check
      _
    $region19: #{tpu_custom_call.1} parent=1 // pred_check_branch
      %52 = sbr.rel (0) target = $region21
    $region20: #{tpu_custom_call.1} parent=1 // pred_region
      _
    $region21: #{tpu_custom_call.1} parent=1 // pred_fallthru
      _
    // Predicated region
    $region22: #{tpu_custom_call.1} parent=1 // pred_check
      _
    $region23: #{tpu_custom_call.1} parent=1 // pred_check_branch
      %54 = sbr.rel (0) target = $region25
    $region24: #{tpu_custom_call.1} parent=1 // pred_region
      %55 = dma.done [#allocation3], 256
    $region25: #{tpu_custom_call.1} parent=1 // pred_fallthru
      _
    // Predicated region
    $region26: #{tpu_custom_call.1} parent=1 // pred_check
      _
    $region27: #{tpu_custom_call.1} parent=1 // pred_check_branch
      %57 = sbr.rel (0) target = $region29
    $region28: #{tpu_custom_call.1} parent=1 // pred_region
      %58 = dma.done [#allocation6], 1024
    $region29: #{tpu_custom_call.1} parent=1 // pred_fallthru
      _
    // Predicated region
    $region30: #{tpu_custom_call.1} parent=1 // pred_check
      _
    $region31: #{tpu_custom_call.1} parent=1 // pred_check_branch
      %60 = sbr.rel (0) target = $region33
    $region32: #{tpu_custom_call.1} parent=1 // pred_region
      %61 = dma.done [#allocation6], 1024
    $region33: #{tpu_custom_call.1} parent=1 // pred_fallthru
      _
    %v63 = vld [vmem:[#allocation2] sm:$0xff]
    %v64 = vld [vmem:[#allocation2 + $0x8] sm:$0xff]
    %v65 = vpack.c.bf16 %v64, %v63
    %v66 = vld [vmem:[#allocation5] sm:$0xf]
    %v67 = vld [vmem:[#allocation5 + $0x4] sm:$0xf]
    %v68 = vld [vmem:[#allocation5 + $0x8] sm:$0xf]
    %v69 = vld [vmem:[#allocation5 + $0xc] sm:$0xf]
    %v70 = vld [vmem:[#allocation5 + $0x10] sm:$0xf]
    %v71 = vld [vmem:[#allocation5 + $0x14] sm:$0xf]
    %v72 = vld [vmem:[#allocation5 + $0x18] sm:$0xf]
    %v73 = vld [vmem:[#allocation5 + $0x1c] sm:$0xf]
    %v74 = vld [vmem:[#allocation5 + $0x20] sm:$0xf]
    %v75 = vld [vmem:[#allocation5 + $0x24] sm:$0xf]
    %v76 = vld [vmem:[#allocation5 + $0x28] sm:$0xf]
    %v77 = vld [vmem:[#allocation5 + $0x2c] sm:$0xf]
    %v78 = vld [vmem:[#allocation5 + $0x30] sm:$0xf]
    %v79 = vld [vmem:[#allocation5 + $0x34] sm:$0xf]
    %v80 = vld [vmem:[#allocation5 + $0x38] sm:$0xf]
    %v81 = vld [vmem:[#allocation5 + $0x3c] sm:$0xf]
    %v82 = vld [vmem:[%s2] sm:$0x1]
    %v84 = vlaneseq
    %v85 = vshrl.u32 %v84, 7
    %v86 = vsub.s32 0, %v85
    %v87 = vrot.slane %v82, %v86
    %v105 = vunpack.c.l.b16 %v66
    %v106 = vunpack.c.l.b16 %v67
    %v107 = vunpack.c.l.b16 %v68
    %v108 = vunpack.c.l.b16 %v69
    %v109 = vunpack.c.l.b16 %v70
    %v110 = vunpack.c.l.b16 %v71
    %v111 = vunpack.c.l.b16 %v72
    %v112 = vunpack.c.l.b16 %v73
    %v113 = vunpack.c.l.b16 %v74
    %v114 = vunpack.c.l.b16 %v75
    %v115 = vunpack.c.l.b16 %v76
    %v116 = vunpack.c.l.b16 %v77
    %v117 = vunpack.c.l.b16 %v78
    %v118 = vunpack.c.l.b16 %v79
    %v119 = vunpack.c.l.b16 %v80
    %v120 = vunpack.c.l.b16 %v81
    %v121 = vpack.c.b16 %v106, %v105
    %v122 = vpack.c.b16 %v108, %v107
    %v123 = vpack.c.b16 %v110, %v109
    %v124 = vpack.c.b16 %v112, %v111
    %v125 = vpack.c.b16 %v114, %v113
    %v126 = vpack.c.b16 %v116, %v115
    %v127 = vpack.c.b16 %v118, %v117
    %v128 = vpack.c.b16 %v120, %v119
    %137 = vmatprep.subr.bf16.mxu0 0
    %138 = vmatpush1.bf16.msra.mxu0 %v128
    %139 = vmatprep.subr.bf16.mxu0 0
    %140 = vmatpush1.bf16.msra.mxu0 %v127
    %141 = vmatprep.subr.bf16.mxu0 0
    %142 = vmatpush1.bf16.msra.mxu0 %v126
    %143 = vmatprep.subr.bf16.mxu0 0
    %144 = vmatpush1.bf16.msra.mxu0 %v125
    %145 = vmatprep.subr.bf16.mxu0 0
    %146 = vmatpush1.bf16.msra.mxu0 %v124
    %147 = vmatprep.subr.bf16.mxu0 0
    %148 = vmatpush1.bf16.msra.mxu0 %v123
    %149 = vmatprep.subr.bf16.mxu0 0
    %150 = vmatpush1.bf16.msra.mxu0 %v122
    %151 = vmatprep.subr.bf16.mxu0 0
    %152 = vmatpush1.bf16.msra.mxu0 %v121
    %153 = vmatprep.subr.bf16.mxu0 0
    %154 = vmatpush2.bf16.msra.mxu0 0
    %155 = vmatprep.subr.bf16.mxu0 0
    %156 = vmatpush2.bf16.msra.mxu0 0
    %157 = vmatprep.subr.bf16.mxu0 0
    %158 = vmatpush2.bf16.msra.mxu0 0
    %159 = vmatprep.subr.bf16.mxu0 0
    %160 = vmatpush2.bf16.msra.mxu0 0
    %161 = vmatprep.subr.bf16.mxu0 0
    %162 = vmatpush2.bf16.msra.mxu0 0
    %163 = vmatprep.subr.bf16.mxu0 0
    %164 = vmatpush2.bf16.msra.mxu0 0
    %165 = vmatprep.subr.bf16.mxu0 0
    %166 = vmatpush2.bf16.msra.mxu0 0
    %167 = vmatprep.subr.bf16.mxu0 0
    %168 = vmatpush2.bf16.msra.mxu0 0
    %169 = vmatprep.mubr.bf16.mxu0 0
    %170 = vmatmul.mubr.bf16.gmra.mxu0 %v65
    %v171 = vpop.f32.mrf.mxu0
    %v172 = vadd.f32 %v87, %v171
    %v173 = vpop.f32.mrf.mxu0
    %v174 = vpop.f32.mrf.mxu0
    %v175 = vadd.f32 %v87, %v174
    %v176 = vpop.f32.mrf.mxu0
    %177 = vdwg.mxu0
    %v178 = vmax.f32 %v172, 0.0
    %v179 = vmax.f32 %v175, 0.0
    %v180 = vpack.c.bf16 %v179, %v178
    %v181 = vld [vmem:[#allocation7] sm:$0xf]
    %v182 = vld [vmem:[#allocation7 + $0x4] sm:$0xf]
    %v183 = vld [vmem:[#allocation7 + $0x8] sm:$0xf]
    %v184 = vld [vmem:[#allocation7 + $0xc] sm:$0xf]
    %v185 = vld [vmem:[#allocation7 + $0x10] sm:$0xf]
    %v186 = vld [vmem:[#allocation7 + $0x14] sm:$0xf]
    %v187 = vld [vmem:[#allocation7 + $0x18] sm:$0xf]
    %v188 = vld [vmem:[#allocation7 + $0x1c] sm:$0xf]
    %v189 = vld [vmem:[#allocation7 + $0x20] sm:$0xf]
    %v190 = vld [vmem:[#allocation7 + $0x24] sm:$0xf]
    %v191 = vld [vmem:[#allocation7 + $0x28] sm:$0xf]
    %v192 = vld [vmem:[#allocation7 + $0x2c] sm:$0xf]
    %v193 = vld [vmem:[#allocation7 + $0x30] sm:$0xf]
    %v194 = vld [vmem:[#allocation7 + $0x34] sm:$0xf]
    %v195 = vld [vmem:[#allocation7 + $0x38] sm:$0xf]
    %v196 = vld [vmem:[#allocation7 + $0x3c] sm:$0xf]
    %v197 = vld [vmem:[%s4] sm:$0x1]
    %v199 = vlaneseq
    %v200 = vshrl.u32 %v199, 7
    %v201 = vsub.s32 0, %v200
    %v202 = vrot.slane %v197, %v201
    %v220 = vunpack.c.l.b16 %v181
    %v221 = vunpack.c.l.b16 %v182
    %v222 = vunpack.c.l.b16 %v183
    %v223 = vunpack.c.l.b16 %v184
    %v224 = vunpack.c.l.b16 %v185
    %v225 = vunpack.c.l.b16 %v186
    %v226 = vunpack.c.l.b16 %v187
    %v227 = vunpack.c.l.b16 %v188
    %v228 = vunpack.c.l.b16 %v189
    %v229 = vunpack.c.l.b16 %v190
    %v230 = vunpack.c.l.b16 %v191
    %v231 = vunpack.c.l.b16 %v192
    %v232 = vunpack.c.l.b16 %v193
    %v233 = vunpack.c.l.b16 %v194
    %v234 = vunpack.c.l.b16 %v195
    %v235 = vunpack.c.l.b16 %v196
    %v236 = vpack.c.b16 %v221, %v220
    %v237 = vpack.c.b16 %v223, %v222
    %v238 = vpack.c.b16 %v225, %v224
    %v239 = vpack.c.b16 %v227, %v226
    %v240 = vpack.c.b16 %v229, %v228
    %v241 = vpack.c.b16 %v231, %v230
    %v242 = vpack.c.b16 %v233, %v232
    %v243 = vpack.c.b16 %v235, %v234
    %252 = vmatprep.subr.bf16.mxu0 0
    %253 = vmatpush1.bf16.msra.mxu0 %v243
    %254 = vmatprep.subr.bf16.mxu0 0
    %255 = vmatpush1.bf16.msra.mxu0 %v242
    %256 = vmatprep.subr.bf16.mxu0 0
    %257 = vmatpush1.bf16.msra.mxu0 %v241
    %258 = vmatprep.subr.bf16.mxu0 0
    %259 = vmatpush1.bf16.msra.mxu0 %v240
    %260 = vmatprep.subr.bf16.mxu0 0
    %261 = vmatpush1.bf16.msra.mxu0 %v239
    %262 = vmatprep.subr.bf16.mxu0 0
    %263 = vmatpush1.bf16.msra.mxu0 %v238
    %264 = vmatprep.subr.bf16.mxu0 0
    %265 = vmatpush1.bf16.msra.mxu0 %v237
    %266 = vmatprep.subr.bf16.mxu0 0
    %267 = vmatpush1.bf16.msra.mxu0 %v236
    %268 = vmatprep.subr.bf16.mxu0 0
    %269 = vmatpush2.bf16.msra.mxu0 0
    %270 = vmatprep.subr.bf16.mxu0 0
    %271 = vmatpush2.bf16.msra.mxu0 0
    %272 = vmatprep.subr.bf16.mxu0 0
    %273 = vmatpush2.bf16.msra.mxu0 0
    %274 = vmatprep.subr.bf16.mxu0 0
    %275 = vmatpush2.bf16.msra.mxu0 0
    %276 = vmatprep.subr.bf16.mxu0 0
    %277 = vmatpush2.bf16.msra.mxu0 0
    %278 = vmatprep.subr.bf16.mxu0 0
    %279 = vmatpush2.bf16.msra.mxu0 0
    %280 = vmatprep.subr.bf16.mxu0 0
    %281 = vmatpush2.bf16.msra.mxu0 0
    %282 = vmatprep.subr.bf16.mxu0 0
    %283 = vmatpush2.bf16.msra.mxu0 0
    %284 = vmatprep.mubr.bf16.mxu0 0
    %285 = vmatmul.mubr.bf16.gmra.mxu0 %v180
    %v286 = vpop.f32.mrf.mxu0
    %v287 = vadd.f32 %v202, %v286
    %v288 = vpop.f32.mrf.mxu0
    %v289 = vpop.f32.mrf.mxu0
    %v290 = vadd.f32 %v202, %v289
    %v291 = vpop.f32.mrf.mxu0
    %292 = vdwg.mxu0
    %v293 = vpack.c.bf16 %v290, %v287
    %v295 = vunpack.c.l.b16 %v293
    %v296 = vunpack.c.h.b16 %v293
    %v297 = vpack.c.b16 %v295, %v295
    %v298 = vpack.c.b16 %v296, %v296
    %301 = vst [vmem:[#allocation8] sm:$0xf] %v297
    %302 = vst [vmem:[#allocation8 + $0x4] sm:$0xf] %v298
    // Predicated region
    $region34: #{tpu_custom_call.1} parent=1 // pred_check
      _
    $region35: #{tpu_custom_call.1} parent=1 // pred_check_branch
      %304 = sbr.rel (0) target = $region37
    $region36: #{tpu_custom_call.1} parent=1 // pred_region
      %s306 = ssub.s32 128, 128
      %307 = vsyncadd [#allocation4], %s306
      %s308 = sshll.u32 [#allocation8], 4
      %s309 = int_to_ptr.vmem [resolvable:$true] %s308
      %314 = dma.vmem_to_hbm [thread:$0]  %s309, 128, %s5, [#allocation4], 64, 64, 4
    $region37: #{tpu_custom_call.1} parent=1 // pred_fallthru
      _
    // Predicated region
    $region38: #{tpu_custom_call.1} parent=1 // pred_check
      _
    $region39: #{tpu_custom_call.1} parent=1 // pred_check_branch
      %316 = sbr.rel (0) target = $region41
    $region40: #{tpu_custom_call.1} parent=1 // pred_region
      %317 = dma.done [#allocation4], 128
    $region41: #{tpu_custom_call.1} parent=1 // pred_fallthru
      _
    %318 = vsyncpa [#allocation3], 1
    %319 = vsyncpa [#allocation6], 1
    %320 = vsyncpa [#allocation4], 1

</llo_original>
